<compile_context>
chip_gen: v5e
topology: v5e:2x2
jax: 0.10.0
libtpu: 0.0.40
codegen_flags: <defaults>
</compile_context>

<pallas_src>
import functools

import jax
import jax.numpy as jnp
from jax.experimental import pallas as pl
from jax.experimental.pallas import tpu as pltpu

S_CONST = 2.0 / 3.0
A_CONST = 1.7159


def _tpu_generation():
    """Best-effort TPU generation (5, 6, 7, ...); 0 if unknown."""
    try:
        kind = jax.devices()[0].device_kind.lower()
    except Exception:  # pragma: no cover - non-TPU / init failure
        return 0
    for g in (7, 6, 5, 4):
        if f"v{g}" in kind:
            return g
    return 0


def _block_bytes_and_vmem_limit(gen):
    # v7x: 3.2 TB/s HBM -> 8 MiB blocks to amortize ~0.35us/step grid overhead;
    #      in+out double-buffered = 32 MiB == default scoped VMEM, so raise it
    #      (64 MiB physical per TC, leave headroom).
    # v6e: 4 MiB blocks (16 MiB double-buffered, inside 32 MiB default scope).
    # v5e / unknown: 2 MiB (8 MiB double-buffered, inside 16 MiB default).
    if gen >= 7:
        return 8 * 1024 * 1024, 48 * 1024 * 1024
    if gen == 6:
        return 4 * 1024 * 1024, None
    return 2 * 1024 * 1024, None


def _scaled_tanh_kernel(x_ref, o_ref, *, compute_dtype):
    # Elementwise hot path: scale -> tanh (EUP) -> scale, single lane-dense
    # store in the output dtype.
    x = x_ref[...].astype(compute_dtype)
    o_ref[...] = (A_CONST * jnp.tanh(S_CONST * x)).astype(o_ref.dtype)


def _pick_cols(n):
    """Widest lane-dense column count dividing n (fallback: 128 + tail)."""
    for cols in (2048, 1024, 512, 256, 128):
        if n % cols == 0:
            return cols
    return 128


def _run_kernel_2d(x2d, gen):
    rows, cols = x2d.shape
    dtype = x2d.dtype
    itemsize = jnp.dtype(dtype).itemsize
    n = rows * cols

    target_bytes, vmem_limit = _block_bytes_and_vmem_limit(gen)
    # Sublane multiple per dtype (f32: 8, bf16/f16: 16, int8/fp8: 32).
    sub = {4: 8, 2: 16, 1: 32}.get(itemsize, 8)

    block_rows = (target_bytes // itemsize) // cols
    block_rows = max(sub, (block_rows // sub) * sub)
    if block_rows >= rows:
        block_rows = rows  # full extent is always a legal block dim
        # v7x megacore: ensure >= 2 grid steps for inputs > ~1 MiB so both
        # TensorCores get work.
        if gen >= 7 and n * itemsize > (1 << 20) and rows >= 2 * sub:
            half = pl.cdiv(pl.cdiv(rows, 2), sub) * sub
            if half < rows:
                block_rows = half
    grid = (pl.cdiv(rows, block_rows),)

    # Native 16-bit compute on v6e/v7x (bf16 VPU + EUP); f32 otherwise.
    compute_dtype = dtype if (itemsize == 2 and gen >= 6) else jnp.float32
    kernel = functools.partial(_scaled_tanh_kernel, compute_dtype=compute_dtype)

    return pl.pallas_call(
        kernel,
        out_shape=jax.ShapeDtypeStruct((rows, cols), dtype),
        grid=grid,
        in_specs=[pl.BlockSpec((block_rows, cols), lambda i: (i, 0))],
        out_specs=pl.BlockSpec((block_rows, cols), lambda i: (i, 0)),
        compiler_params=pltpu.CompilerParams(
            dimension_semantics=("parallel",),
            vmem_limit_bytes=vmem_limit),
        cost_estimate=pl.CostEstimate(
            flops=2 * n, transcendentals=n, bytes_accessed=2 * n * itemsize),
    )(x2d)


def _scaled_tanh_impl(x):
    orig_shape = x.shape
    n = x.size
    if n == 0:
        return x
    gen = _tpu_generation()

    cols = _pick_cols(n)
    tail = n % cols
    n_bulk = n - tail

    x_flat = jnp.reshape(x, (-1,))  # contiguous flatten: layout no-op under jit
    parts = []
    if n_bulk:
        bulk = x_flat if tail == 0 else x_flat[:n_bulk]
        out_bulk = _run_kernel_2d(jnp.reshape(bulk, (n_bulk // cols, cols)), gen)
        parts.append(jnp.reshape(out_bulk, (-1,)))
    if tail:
        # <cols-element tail: plain jnp, fuses under jit; avoids a full
        # pad/copy of the tensor that the old fallback did.
        t = x_flat[n_bulk:].astype(jnp.float32)
        parts.append((A_CONST * jnp.tanh(S_CONST * t)).astype(x.dtype))

    out_flat = parts[0] if len(parts) == 1 else jnp.concatenate(parts)
    return jnp.reshape(out_flat, orig_shape)


# jit so all reshapes/slices fuse around the pallas_call.
scaled_tanh = jax.jit(_scaled_tanh_impl)


if __name__ == "__main__":
    key = jax.random.PRNGKey(0)

    def ref(v):
        return A_CONST * jnp.tanh(S_CONST * v)

    # NCHW input, matching the PyTorch convention (batch=2, channels=4, 16x16).
    x = jax.random.normal(key, (2, 4, 16, 16), dtype=jnp.float32)
    y = scaled_tanh(x)
    jax.block_until_ready(y)
    assert y.shape == x.shape and y.dtype == x.dtype
    assert jnp.allclose(y, ref(x), atol=1e-6, rtol=1e-6)

    # Exercise the bulk + tail path (numel not a multiple of 128).
    x2 = jax.random.normal(jax.random.PRNGKey(1), (1, 200), dtype=jnp.float32)
    y2 = scaled_tanh(x2)
    jax.block_until_ready(y2)
    assert y2.shape == x2.shape and y2.dtype == x2.dtype
    assert jnp.allclose(y2, ref(x2), atol=1e-6, rtol=1e-6)

    print("KERNEL_OK")
</pallas_src>

<mosaic_0001>
module attributes {stable_mosaic.version = 11 : i64} {
  func.func @_scaled_tanh_kernel(%arg0: i32, %arg1: memref<1x2048xf32, #tpu.memory_space<vmem>>, %arg2: memref<1x2048xf32, #tpu.memory_space<vmem>>) attributes {dimension_semantics = [#tpu.dimension_semantics<parallel>], iteration_bounds = array<i64: 1>, scalar_prefetch = 0 : i64, scratch_operands = 0 : i64, tpu.core_type = #tpu.core_type<tc>, window_params = [{transform_indices = @transform_0, window_bounds = array<i64: 1, 2048>}, {transform_indices = @transform_1, window_bounds = array<i64: 1, 2048>}]} {
    %c0 = arith.constant 0 : index
    %c0_0 = arith.constant 0 : index
    %0 = vector.load %arg1[%c0, %c0_0] : memref<1x2048xf32, #tpu.memory_space<vmem>>, vector<1x2048xf32>
    %cst = arith.constant 0.666666686 : f32
    %1 = vector.broadcast %cst : f32 to vector<1x2048xf32>
    %2 = arith.mulf %1, %0 : vector<1x2048xf32>
    %3 = math.tanh %2 : vector<1x2048xf32>
    %cst_1 = arith.constant 1.715900e+00 : f32
    %4 = vector.broadcast %cst_1 : f32 to vector<1x2048xf32>
    %5 = arith.mulf %4, %3 : vector<1x2048xf32>
    %c0_2 = arith.constant 0 : index
    %c0_3 = arith.constant 0 : index
    %6 = vector.load %arg2[%c0_2, %c0_3] : memref<1x2048xf32, #tpu.memory_space<vmem>>, vector<1x2048xf32>
    tpu.vector_store %arg2[%c0_2, %c0_3], %5 {strides = array<i32>} : memref<1x2048xf32, #tpu.memory_space<vmem>>, vector<1x2048xf32>,
    return
  }
  func.func @transform_0(%arg0: i32) -> (i32, i32) {
    %c0_i32 = arith.constant 0 : i32
    %c0_i32_0 = arith.constant 0 : i32
    return %arg0, %c0_i32 : i32, i32
  }
  func.func @transform_1(%arg0: i32) -> (i32, i32) {
    %c0_i32 = arith.constant 0 : i32
    %c0_i32_0 = arith.constant 0 : i32
    return %arg0, %c0_i32 : i32, i32
  }
}

</mosaic_0001>

<llo_original>
// kernel: _scaled_tanh_impl.1
$region0: #{_scaled_tanh_impl.1}
  #allocation0 [shape = 'u32[]', space=smem, size = 0x4, offset = 0x4, fixed_abs, tag = 'smem constant byte address 0x4 - core index']
  #allocation1 [shape = 'u32[72,128]{1,0:T(1,128)}', space=vmem, size = 0x9000, scoped, tag = 'internal scratch']
  %s0 = inlined_call_operand.vmem [shape: f32[1,2048], index: 0, kind: input, shape index: {}]
  %s1 = inlined_call_operand.vmem [shape: f32[1,2048], index: 1, kind: output, shape index: {}]
  %s2 = sld [smem:[#allocation0]]
  $region14: #{_scaled_tanh_impl.1} parent=0
    _
  %s4 = ssub.s32 1, %s2
  %s5 = scalar_select 0, %s4, %s2
  // Predicated region
  $region2: #{_scaled_tanh_impl.1} parent=0 // pred_check
    _
  $region3: #{_scaled_tanh_impl.1} parent=0 // pred_check_branch
    %7 = sbr.rel (0) target = $region5
  $region4: #{_scaled_tanh_impl.1} parent=0 // pred_region
    _
  $region5: #{_scaled_tanh_impl.1} parent=0 // pred_fallthru
    _
  %v8 = vld [vmem:[%s0] sm:$0xff]
  %v9 = vld [vmem:[%s0 + $0x8] sm:$0xff]
  %v10 = vmul.f32 %v8, 0.6666667
  %v11 = vmul.f32 %v9, 0.6666667
  %v12 = vtanh.pop %v10
  %v13 = vtanh.pop %v11
  %v14 = vmul.f32 %v12, 1.7159
  %v15 = vmul.f32 %v13, 1.7159
  %16 = vst [vmem:[%s1] sm:$0xff] %v14
  %17 = vst [vmem:[%s1 + $0x8] sm:$0xff] %v15
  // Predicated region
  $region6: #{_scaled_tanh_impl.1} parent=0 // pred_check
    _
  $region7: #{_scaled_tanh_impl.1} parent=0 // pred_check_branch
    %19 = sbr.rel (0) target = $region9
  $region8: #{_scaled_tanh_impl.1} parent=0 // pred_region
    _
  $region9: #{_scaled_tanh_impl.1} parent=0 // pred_fallthru
    _
  // Predicated region
  $region10: #{_scaled_tanh_impl.1} parent=0 // pred_check
    _
  $region11: #{_scaled_tanh_impl.1} parent=0 // pred_check_branch
    %21 = sbr.rel (0) target = $region13
  $region12: #{_scaled_tanh_impl.1} parent=0 // pred_region
    _
  $region13: #{_scaled_tanh_impl.1} parent=0 // pred_fallthru
    _

</llo_original>
